<compile_context>
chip_gen: v7x
topology: tpu7x:2x2x1
jax: 0.10.0
libtpu: 0.0.40
codegen_flags: <defaults>
</compile_context>

<pallas_src>
import functools

import jax
import jax.numpy as jnp
from jax.experimental import pallas as pl
from jax.experimental.pallas import tpu as pltpu


def _causal_conv_kernel(x_ref, xprev_ref, wfg_ref, bfg_ref, wrs_ref, brs_ref,
                        res_ref, skip_ref, carry_ref,
                        *, kernel_size, dilation, channels, tt, halo,
                        compute_dtype):
    """One (batch, time-chunk, time-tile) block per grid step.

    x_ref    : (1, C, tt)   current input tile, native dtype (auto-pipelined)
    xprev_ref: (1, C, tt)   last tile of the previous time chunk (same array as
                            x; block index is constant within a chunk so the
                            pipeline re-fetches it at most once per chunk)
    wfg_ref  : (2C, K*C)    fused per-tap filter/gate weights (compute dtype)
    bfg_ref  : (2C, 1) f32
    wrs_ref  : (2C, C)      [residual ; skip] 1x1 weights, fused
    brs_ref  : (2C, 1) f32
    res_ref  : (1, C, tt)   residual output tile (out dtype)
    skip_ref : (1, C, tt)   skip output tile (out dtype)
    carry_ref: (C, max(halo,1)) carried input halo (compute dtype); persists
                            across the time tiles of one (batch, chunk) row.
    """
    C = channels
    K = kernel_size
    chunk = pl.program_id(1)      # time chunk (parallel)
    j = pl.program_id(2)          # time tile within the chunk (sequential)

    x_nat = x_ref[0]                          # (C, tt) native dtype (residual path)
    x_cd = x_nat.astype(compute_dtype)        # matmul operand (cast done in VMEM)

    if halo > 0:
        # (Re)seed the carried halo at the start of every (batch, chunk) row.
        @pl.when(j == 0)
        def _init_carry():
            @pl.when(chunk == 0)
            def _zero():                      # causal left zero-padding
                carry_ref[...] = jnp.zeros(carry_ref.shape, carry_ref.dtype)

            @pl.when(chunk > 0)
            def _from_prev_chunk():           # tail of the previous chunk's last tile
                carry_ref[...] = xprev_ref[0, :, tt - halo:tt].astype(carry_ref.dtype)

        window = jnp.concatenate([carry_ref[...], x_cd], axis=1)   # (C, tt+halo)
    else:
        window = x_cd

    # im2col: K dilation-shifted views stacked along channels -> ONE MXU matmul
    # with contraction K*C (output column t needs window cols t, t+d, ..., t+(K-1)d).
    if K > 1:
        stacked = jnp.concatenate(
            [window[:, k * dilation:k * dilation + tt] for k in range(K)], axis=0)
    else:
        stacked = window                                            # (K*C, tt)

    fg = jnp.dot(wfg_ref[...], stacked, preferred_element_type=jnp.float32)
    fg = fg + bfg_ref[...]                                          # (2C, tt) f32

    # f32 epilogue (v5e has no bf16 VPU/EUP; hidden under the DMA anyway).
    z = jnp.tanh(fg[:C, :]) * jax.nn.sigmoid(fg[C:, :])             # (C, tt) f32

    # Fused residual + skip 1x1 convs: single (2C, C) @ (C, tt) matmul.
    rs = jnp.dot(wrs_ref[...], z.astype(wrs_ref.dtype),
                 preferred_element_type=jnp.float32)
    rs = rs + brs_ref[...]                                          # (2C, tt) f32

    res_ref[0] = (x_nat.astype(jnp.float32) + rs[:C, :]).astype(res_ref.dtype)
    skip_ref[0] = rs[C:, :].astype(skip_ref.dtype)

    if halo > 0:
        # Slide the carry: keep the last `halo` input columns for the next tile.
        carry_ref[...] = window[:, tt:tt + halo]


def causal_conv_layer(x_ncl, params, *, kernel_size, dilation, use_padding,
                      time_tile=1024, time_chunks=None,
                      compute_dtype=jnp.bfloat16, out_dtype=None):
    """x_ncl: (B, C, T) in the PyTorch NCL layout. Returns (residual, skip).

    out_dtype defaults to x.dtype; HBM-bandwidth-bound callers should pass
    jnp.bfloat16 to halve the (dominant) output writeback traffic.
    """
    w_fg, b_fg, w_res, b_res, w_skip, b_skip = params
    B, C, T = x_ncl.shape
    K = kernel_size
    halo = (K - 1) * dilation
    out_dtype = x_ncl.dtype if out_dtype is None else out_dtype
    if not use_padding:
        assert T > halo, "unpadded conv needs T > (kernel_size-1)*dilation"

    # The kernel always computes the causally-padded formulation (output length
    # T, zero left-halo seeded in VMEM); the unpadded result is its tail.
    # Lane-dense time tile: a multiple of 128, or the full axis when T is small.
    tt_cfg = max(128, (int(time_tile) // 128) * 128)
    tt_cfg = max(tt_cfg, pl.cdiv(halo, 128) * 128)   # keep tile >= halo when tiling
    tt = T if T <= tt_cfg else tt_cfg
    total_tiles = pl.cdiv(T, tt)

    # Optional parallel time-chunk axis (keeps both v7x TensorCores busy when
    # batch alone cannot). Needs an even split and halo <= tt so the chunk
    # boundary halo is the tail of exactly one previous tile.
    nc = (2 if B < 2 else 1) if time_chunks is None else int(time_chunks)
    if nc < 1 or total_tiles % nc != 0 or (nc > 1 and halo > tt):
        nc = 1
    nt = total_tiles // nc

    # Weight prep (tiny): filter/gate (2C, C, K) -> (2C, K*C) tap-major to match
    # the im2col stack; residual + skip 1x1 fused as rows [0:C]=res, [C:2C]=skip.
    wfg_flat = jnp.transpose(w_fg, (0, 2, 1)).reshape(2 * C, K * C).astype(compute_dtype)
    bfg = b_fg[:, None].astype(jnp.float32)
    wrs = jnp.concatenate([w_res[:, :, 0], w_skip[:, :, 0]], axis=0).astype(compute_dtype)
    brs = jnp.concatenate([b_res, b_skip], axis=0)[:, None].astype(jnp.float32)

    halo_alloc = max(halo, 1)
    kernel = functools.partial(_causal_conv_kernel,
                               kernel_size=K, dilation=dilation, channels=C,
                               tt=tt, halo=halo, compute_dtype=compute_dtype)

    # VMEM budget: double-buffered x/x_prev/res/skip blocks + carry + temporaries.
    x_b = jnp.dtype(x_ncl.dtype).itemsize
    o_b = jnp.dtype(out_dtype).itemsize
    c_b = jnp.dtype(compute_dtype).itemsize
    vmem_need = (4 * C * tt * x_b                   # x + x_prev, double-buffered
                 + 4 * C * tt * o_b                 # res + skip, double-buffered
                 + C * halo_alloc * c_b             # carry
                 + (K + 2) * C * tt * c_b           # window + im2col stack + z cast
                 + 6 * C * tt * 4                   # fg / z / rs f32 temporaries
                 + 2 * (2 * C) * (K * C + C + 2) * 4)   # weights (double-buffered)
    vmem_limit = int(max(min(2 * vmem_need, 32 << 20),  # v7x-safe (64 MiB physical)
                         vmem_need + (4 << 20), 8 << 20))

    x_spec = pl.BlockSpec((1, C, tt), lambda b, c, j: (b, 0, c * nt + j))
    xprev_spec = pl.BlockSpec((1, C, tt),
                              lambda b, c, j: (b, 0, jnp.maximum(c * nt - 1, 0)))
    out_spec = pl.BlockSpec((1, C, tt), lambda b, c, j: (b, 0, c * nt + j))

    res, skip = pl.pallas_call(
        kernel,
        out_shape=(jax.ShapeDtypeStruct((B, C, T), out_dtype),
                   jax.ShapeDtypeStruct((B, C, T), out_dtype)),
        grid_spec=pltpu.PrefetchScalarGridSpec(
            num_scalar_prefetch=0,
            grid=(B, nc, nt),
            in_specs=[
                x_spec,                                              # x (current tile)
                xprev_spec,                                          # x (chunk-boundary halo)
                pl.BlockSpec((2 * C, K * C), lambda b, c, j: (0, 0)),  # wfg
                pl.BlockSpec((2 * C, 1), lambda b, c, j: (0, 0)),      # bfg
                pl.BlockSpec((2 * C, C), lambda b, c, j: (0, 0)),      # wrs
                pl.BlockSpec((2 * C, 1), lambda b, c, j: (0, 0)),      # brs
            ],
            out_specs=[out_spec, out_spec],
            scratch_shapes=[pltpu.VMEM((C, halo_alloc), compute_dtype)],
        ),
        compiler_params=pltpu.CompilerParams(
            # Batch & chunk axes are parallel (megacore); the time-tile axis must
            # stay "arbitrary" because the carried halo makes it sequential.
            dimension_semantics=("parallel", "parallel", "arbitrary"),
            vmem_limit_bytes=vmem_limit,
        ),
    )(x_ncl, x_ncl, wfg_flat, bfg, wrs, brs)

    if not use_padding:
        # Unpadded semantics == padded output with the first `halo` columns dropped.
        res = res[:, :, halo:]
        skip = skip[:, :, halo:]
    return res, skip


def reference_forward(x_ncl, params, *, kernel_size, dilation, use_padding,
                      mirror_kernel_numerics=False):
    """Pure-JAX reference matching the PyTorch module. With
    mirror_kernel_numerics=True the matmul operands are rounded to bf16
    (f32 accumulation and f32 residual input), mirroring the kernel."""
    w_fg, b_fg, w_res, b_res, w_skip, b_skip = params
    q = ((lambda a: a.astype(jnp.bfloat16).astype(jnp.float32))
         if mirror_kernel_numerics else (lambda a: a))
    C = x_ncl.shape[1]
    pad = (kernel_size - 1) * dilation
    xp = jnp.pad(x_ncl, ((0, 0), (0, 0), (pad, 0))) if use_padding else x_ncl
    t_pad = xp.shape[-1]
    t_out = t_pad - pad
    xq = q(xp)
    fg = b_fg[None, :, None]
    for k in range(kernel_size):
        fg = fg + jnp.einsum('oc,bct->bot', q(w_fg[:, :, k]),
                             xq[:, :, k * dilation:k * dilation + t_out])
    z = jnp.tanh(fg[:, :C, :]) * jax.nn.sigmoid(fg[:, C:, :])
    res = xp[:, :, t_pad - t_out:] + jnp.einsum('oc,bct->bot', q(w_res[:, :, 0]), q(z)) \
        + b_res[None, :, None]
    skip = jnp.einsum('oc,bct->bot', q(w_skip[:, :, 0]), q(z)) + b_skip[None, :, None]
    return res, skip


def init_params(key, channels, kernel_size):
    """Deterministic parameter init matching the PyTorch module's shapes."""
    ks = jax.random.split(key, 6)
    w_fg = jax.random.normal(ks[0], (2 * channels, channels, kernel_size), jnp.float32) * 0.2
    b_fg = jax.random.normal(ks[1], (2 * channels,), jnp.float32) * 0.1
    w_res = jax.random.normal(ks[2], (channels, channels, 1), jnp.float32) * 0.2
    b_res = jax.random.normal(ks[3], (channels,), jnp.float32) * 0.1
    w_skip = jax.random.normal(ks[4], (channels, channels, 1), jnp.float32) * 0.2
    b_skip = jax.random.normal(ks[5], (channels,), jnp.float32) * 0.1
    return (w_fg, b_fg, w_res, b_res, w_skip, b_skip)


if __name__ == "__main__":
    key = jax.random.PRNGKey(0)
    k_x, k_p, k_x2, k_p2 = jax.random.split(key, 4)

    # --- check 1: small shapes, padded, default (f32) outputs -----------------
    B, C, T = 2, 4, 16
    kernel_size, dilation = 2, 2
    x = jax.random.normal(k_x, (B, C, T), jnp.float32)
    params = init_params(k_p, C, kernel_size)

    res, skip = causal_conv_layer(x, params, kernel_size=kernel_size,
                                  dilation=dilation, use_padding=True)
    jax.block_until_ready((res, skip))
    res_ref, skip_ref = reference_forward(x, params, kernel_size=kernel_size,
                                          dilation=dilation, use_padding=True,
                                          mirror_kernel_numerics=True)
    assert res.shape == (B, C, T) and skip.shape == (B, C, T)
    assert jnp.allclose(res, res_ref, atol=1e-3, rtol=1e-3)
    assert jnp.allclose(skip, skip_ref, atol=1e-3, rtol=1e-3)

    # --- check 2: unpadded path ------------------------------------------------
    res_u, skip_u = causal_conv_layer(x, params, kernel_size=kernel_size,
                                      dilation=dilation, use_padding=False)
    jax.block_until_ready((res_u, skip_u))
    res_ur, skip_ur = reference_forward(x, params, kernel_size=kernel_size,
                                        dilation=dilation, use_padding=False,
                                        mirror_kernel_numerics=True)
    t_unp = T - (kernel_size - 1) * dilation
    assert res_u.shape == (B, C, t_unp) and skip_u.shape == (B, C, t_unp)
    assert jnp.allclose(res_u, res_ur, atol=1e-3, rtol=1e-3)
    assert jnp.allclose(skip_u, skip_ur, atol=1e-3, rtol=1e-3)

    # --- check 3: batch=1, two parallel time chunks, bf16 outputs --------------
    B2, C2, T2 = 1, 8, 256
    ks2, d2 = 2, 4
    x2 = jax.random.normal(k_x2, (B2, C2, T2), jnp.float32)
    params2 = init_params(k_p2, C2, ks2)
    res2, skip2 = causal_conv_layer(x2, params2, kernel_size=ks2, dilation=d2,
                                    use_padding=True, time_tile=128,
                                    time_chunks=2, out_dtype=jnp.bfloat16)
    jax.block_until_ready((res2, skip2))
    res2_ref, skip2_ref = reference_forward(x2, params2, kernel_size=ks2,
                                            dilation=d2, use_padding=True,
                                            mirror_kernel_numerics=True)
    assert res2.dtype == jnp.bfloat16 and res2.shape == (B2, C2, T2)
    assert jnp.allclose(res2.astype(jnp.float32), res2_ref, atol=3e-2, rtol=3e-2)
    assert jnp.allclose(skip2.astype(jnp.float32), skip2_ref, atol=3e-2, rtol=3e-2)

    print("KERNEL_OK")
</pallas_src>

<mosaic_0001>
module attributes {stable_mosaic.version = 11 : i64} {
  func.func @_causal_conv_kernel(%arg0: i32, %arg1: i32, %arg2: i32, %arg3: memref<1x4x16xf32, #tpu.memory_space<vmem>>, %arg4: memref<1x4x16xf32, #tpu.memory_space<vmem>>, %arg5: memref<8x8xbf16, #tpu.memory_space<vmem>>, %arg6: memref<8x1xf32, #tpu.memory_space<vmem>>, %arg7: memref<8x4xbf16, #tpu.memory_space<vmem>>, %arg8: memref<8x1xf32, #tpu.memory_space<vmem>>, %arg9: memref<1x4x16xf32, #tpu.memory_space<vmem>>, %arg10: memref<1x4x16xf32, #tpu.memory_space<vmem>>, %arg11: memref<4x2xbf16, #tpu.memory_space<vmem>>) attributes {dimension_semantics = [#tpu.dimension_semantics<parallel>, #tpu.dimension_semantics<parallel>, #tpu.dimension_semantics<arbitrary>], iteration_bounds = array<i64: 2, 1, 1>, scalar_prefetch = 0 : i64, scratch_operands = 1 : i64, tpu.core_type = #tpu.core_type<tc>, window_params = [{transform_indices = @transform_0, window_bounds = array<i64: 1, 4, 16>}, {transform_indices = @transform_1, window_bounds = array<i64: 1, 4, 16>}, {pipeline_mode = #tpu.pipeline_mode<synchronous>, transform_indices = @transform_2, window_bounds = array<i64: 8, 8>}, {pipeline_mode = #tpu.pipeline_mode<synchronous>, transform_indices = @transform_3, window_bounds = array<i64: 8, 1>}, {pipeline_mode = #tpu.pipeline_mode<synchronous>, transform_indices = @transform_4, window_bounds = array<i64: 8, 4>}, {pipeline_mode = #tpu.pipeline_mode<synchronous>, transform_indices = @transform_5, window_bounds = array<i64: 8, 1>}, {transform_indices = @transform_6, window_bounds = array<i64: 1, 4, 16>}, {transform_indices = @transform_7, window_bounds = array<i64: 1, 4, 16>}]} {
    %c0 = arith.constant 0 : index
    %c0_0 = arith.constant 0 : index
    %c0_1 = arith.constant 0 : index
    %0 = vector.load %arg3[%c0, %c0_0, %c0_1] : memref<1x4x16xf32, #tpu.memory_space<vmem>>, vector<1x4x16xf32>
    %1 = vector.shape_cast %0 : vector<1x4x16xf32> to vector<4x16xf32>
    %2 = arith.truncf %1 : vector<4x16xf32> to vector<4x16xbf16>
    %c0_i32 = arith.constant 0 : i32
    %3 = arith.cmpi eq, %arg2, %c0_i32 : i32
    %4 = arith.extui %3 : i1 to i32
    %c0_i32_2 = arith.constant 0 : i32
    %5 = arith.cmpi ne, %4, %c0_i32_2 : i32
    scf.if %5 {
      %c0_i32_23 = arith.constant 0 : i32
      %42 = arith.cmpi eq, %arg1, %c0_i32_23 : i32
      %43 = arith.extui %42 : i1 to i32
      %c0_i32_24 = arith.constant 0 : i32
      %44 = arith.cmpi ne, %43, %c0_i32_24 : i32
      scf.if %44 {
        %cst_27 = arith.constant 0.000000e+00 : bf16
        %48 = vector.broadcast %cst_27 : bf16 to vector<4x2xbf16>
        %c0_28 = arith.constant 0 : index
        %c0_29 = arith.constant 0 : index
        %49 = vector.load %arg11[%c0_28, %c0_29] : memref<4x2xbf16, #tpu.memory_space<vmem>>, vector<4x2xbf16>
        tpu.vector_store %arg11[%c0_28, %c0_29], %48 {strides = array<i32>} : memref<4x2xbf16, #tpu.memory_space<vmem>>, vector<4x2xbf16>,
      } else {
      }
      %c0_i32_25 = arith.constant 0 : i32
      %45 = arith.cmpi sgt, %arg1, %c0_i32_25 : i32
      %46 = arith.extui %45 : i1 to i32
      %c0_i32_26 = arith.constant 0 : i32
      %47 = arith.cmpi ne, %46, %c0_i32_26 : i32
      scf.if %47 {
        %c0_27 = arith.constant 0 : index
        %c0_28 = arith.constant 0 : index
        %c14 = arith.constant 14 : index
        %48 = vector.load %arg4[%c0_27, %c0_28, %c14] : memref<1x4x16xf32, #tpu.memory_space<vmem>>, vector<1x4x2xf32>
        %49 = vector.shape_cast %48 : vector<1x4x2xf32> to vector<4x2xf32>
        %50 = arith.truncf %49 : vector<4x2xf32> to vector<4x2xbf16>
        %c0_29 = arith.constant 0 : index
        %c0_30 = arith.constant 0 : index
        %51 = vector.load %arg11[%c0_29, %c0_30] : memref<4x2xbf16, #tpu.memory_space<vmem>>, vector<4x2xbf16>
        tpu.vector_store %arg11[%c0_29, %c0_30], %50 {strides = array<i32>} : memref<4x2xbf16, #tpu.memory_space<vmem>>, vector<4x2xbf16>,
      } else {
      }
    } else {
    }
    %c0_3 = arith.constant 0 : index
    %c0_4 = arith.constant 0 : index
    %6 = vector.load %arg11[%c0_3, %c0_4] : memref<4x2xbf16, #tpu.memory_space<vmem>>, vector<4x2xbf16>
    %7 = tpu.concatenate %6, %2 in 1 : vector<4x2xbf16>, vector<4x16xbf16> -> vector<4x18xbf16>
    %8 = vector.extract_strided_slice %7 {offsets = [0, 0], sizes = [4, 16], strides = [1, 1]} : vector<4x18xbf16> to vector<4x16xbf16>
    %9 = vector.extract_strided_slice %7 {offsets = [0, 2], sizes = [4, 16], strides = [1, 1]} : vector<4x18xbf16> to vector<4x16xbf16>
    %10 = tpu.concatenate %8, %9 in 0 : vector<4x16xbf16>, vector<4x16xbf16> -> vector<8x16xbf16>
    %c0_5 = arith.constant 0 : index
    %c0_6 = arith.constant 0 : index
    %11 = vector.load %arg5[%c0_5, %c0_6] : memref<8x8xbf16, #tpu.memory_space<vmem>>, vector<8x8xbf16>
    %cst = arith.constant dense<0.000000e+00> : vector<8x16xf32>
    %12 = tpu.matmul %11, %10, %cst {dimension_numbers = #tpu.dot_dimension_numbers<[1], [0], [0], [1], [0, 0, 1, 1], [], []>} : vector<8x8xbf16>, vector<8x16xbf16>, vector<8x16xf32> -> vector<8x16xf32>
    %c0_7 = arith.constant 0 : index
    %c0_8 = arith.constant 0 : index
    %13 = vector.load %arg6[%c0_7, %c0_8] : memref<8x1xf32, #tpu.memory_space<vmem>>, vector<8x1xf32>
    %14 = vector.broadcast %13 : vector<8x1xf32> to vector<8x16xf32>
    %15 = arith.addf %12, %14 : vector<8x16xf32>
    %16 = vector.extract_strided_slice %15 {offsets = [0, 0], sizes = [4, 16], strides = [1, 1]} : vector<8x16xf32> to vector<4x16xf32>
    %17 = math.tanh %16 : vector<4x16xf32>
    %18 = vector.extract_strided_slice %15 {offsets = [4, 0], sizes = [4, 16], strides = [1, 1]} : vector<8x16xf32> to vector<4x16xf32>
    %19 = arith.negf %18 : vector<4x16xf32>
    %20 = math.exp %19 : vector<4x16xf32>
    %cst_9 = arith.constant 1.000000e+00 : f32
    %21 = vector.broadcast %cst_9 : f32 to vector<4x16xf32>
    %22 = arith.addf %21, %20 : vector<4x16xf32>
    %23 = arith.divf %21, %22 : vector<4x16xf32>
    %24 = arith.mulf %17, %23 : vector<4x16xf32>
    %c0_10 = arith.constant 0 : index
    %c0_11 = arith.constant 0 : index
    %25 = vector.load %arg7[%c0_10, %c0_11] : memref<8x4xbf16, #tpu.memory_space<vmem>>, vector<8x4xbf16>
    %26 = arith.truncf %24 : vector<4x16xf32> to vector<4x16xbf16>
    %cst_12 = arith.constant dense<0.000000e+00> : vector<8x16xf32>
    %27 = tpu.matmul %25, %26, %cst_12 {dimension_numbers = #tpu.dot_dimension_numbers<[1], [0], [0], [1], [0, 0, 1, 1], [], []>} : vector<8x4xbf16>, vector<4x16xbf16>, vector<8x16xf32> -> vector<8x16xf32>
    %c0_13 = arith.constant 0 : index
    %c0_14 = arith.constant 0 : index
    %28 = vector.load %arg8[%c0_13, %c0_14] : memref<8x1xf32, #tpu.memory_space<vmem>>, vector<8x1xf32>
    %29 = vector.broadcast %28 : vector<8x1xf32> to vector<8x16xf32>
    %30 = arith.addf %27, %29 : vector<8x16xf32>
    %31 = vector.extract_strided_slice %30 {offsets = [0, 0], sizes = [4, 16], strides = [1, 1]} : vector<8x16xf32> to vector<4x16xf32>
    %32 = arith.addf %1, %31 : vector<4x16xf32>
    %c0_15 = arith.constant 0 : index
    %c0_16 = arith.constant 0 : index
    %c0_17 = arith.constant 0 : index
    %33 = vector.load %arg9[%c0_15, %c0_16, %c0_17] : memref<1x4x16xf32, #tpu.memory_space<vmem>>, vector<1x4x16xf32>
    %34 = vector.shape_cast %33 : vector<1x4x16xf32> to vector<4x16xf32>
    %35 = vector.shape_cast %32 : vector<4x16xf32> to vector<1x4x16xf32>
    tpu.vector_store %arg9[%c0_15, %c0_16, %c0_17], %35 {strides = array<i32>} : memref<1x4x16xf32, #tpu.memory_space<vmem>>, vector<1x4x16xf32>,
    %36 = vector.extract_strided_slice %30 {offsets = [4, 0], sizes = [4, 16], strides = [1, 1]} : vector<8x16xf32> to vector<4x16xf32>
    %c0_18 = arith.constant 0 : index
    %c0_19 = arith.constant 0 : index
    %c0_20 = arith.constant 0 : index
    %37 = vector.load %arg10[%c0_18, %c0_19, %c0_20] : memref<1x4x16xf32, #tpu.memory_space<vmem>>, vector<1x4x16xf32>
    %38 = vector.shape_cast %37 : vector<1x4x16xf32> to vector<4x16xf32>
    %39 = vector.shape_cast %36 : vector<4x16xf32> to vector<1x4x16xf32>
    tpu.vector_store %arg10[%c0_18, %c0_19, %c0_20], %39 {strides = array<i32>} : memref<1x4x16xf32, #tpu.memory_space<vmem>>, vector<1x4x16xf32>,
    %40 = vector.extract_strided_slice %7 {offsets = [0, 16], sizes = [4, 2], strides = [1, 1]} : vector<4x18xbf16> to vector<4x2xbf16>
    %c0_21 = arith.constant 0 : index
    %c0_22 = arith.constant 0 : index
    %41 = vector.load %arg11[%c0_21, %c0_22] : memref<4x2xbf16, #tpu.memory_space<vmem>>, vector<4x2xbf16>
    tpu.vector_store %arg11[%c0_21, %c0_22], %40 {strides = array<i32>} : memref<4x2xbf16, #tpu.memory_space<vmem>>, vector<4x2xbf16>,
    return
  }
  func.func @transform_0(%arg0: i32, %arg1: i32, %arg2: i32) -> (i32, i32, i32) {
    %c1_i32 = arith.constant 1 : i32
    %0 = arith.muli %arg1, %c1_i32 : i32
    %1 = arith.addi %0, %arg2 : i32
    %c0_i32 = arith.constant 0 : i32
    %c0_i32_0 = arith.constant 0 : i32
    return %arg0, %c0_i32, %1 : i32, i32, i32
  }
  func.func @transform_1(%arg0: i32, %arg1: i32, %arg2: i32) -> (i32, i32, i32) {
    %c1_i32 = arith.constant 1 : i32
    %0 = arith.muli %arg1, %c1_i32 : i32
    %c1_i32_0 = arith.constant 1 : i32
    %1 = arith.subi %0, %c1_i32_0 : i32
    %c0_i32 = arith.constant 0 : i32
    %2 = arith.maxsi %1, %c0_i32 : i32
    %c0_i32_1 = arith.constant 0 : i32
    %c0_i32_2 = arith.constant 0 : i32
    return %arg0, %c0_i32_1, %2 : i32, i32, i32
  }
  func.func @transform_2(%arg0: i32, %arg1: i32, %arg2: i32) -> (i32, i32) {
    %c0_i32 = arith.constant 0 : i32
    %c0_i32_0 = arith.constant 0 : i32
    %c0_i32_1 = arith.constant 0 : i32
    return %c0_i32, %c0_i32_0 : i32, i32
  }
  func.func @transform_3(%arg0: i32, %arg1: i32, %arg2: i32) -> (i32, i32) {
    %c0_i32 = arith.constant 0 : i32
    %c0_i32_0 = arith.constant 0 : i32
    %c0_i32_1 = arith.constant 0 : i32
    return %c0_i32, %c0_i32_0 : i32, i32
  }
  func.func @transform_4(%arg0: i32, %arg1: i32, %arg2: i32) -> (i32, i32) {
    %c0_i32 = arith.constant 0 : i32
    %c0_i32_0 = arith.constant 0 : i32
    %c0_i32_1 = arith.constant 0 : i32
    return %c0_i32, %c0_i32_0 : i32, i32
  }
  func.func @transform_5(%arg0: i32, %arg1: i32, %arg2: i32) -> (i32, i32) {
    %c0_i32 = arith.constant 0 : i32
    %c0_i32_0 = arith.constant 0 : i32
    %c0_i32_1 = arith.constant 0 : i32
    return %c0_i32, %c0_i32_0 : i32, i32
  }
  func.func @transform_6(%arg0: i32, %arg1: i32, %arg2: i32) -> (i32, i32, i32) {
    %c1_i32 = arith.constant 1 : i32
    %0 = arith.muli %arg1, %c1_i32 : i32
    %1 = arith.addi %0, %arg2 : i32
    %c0_i32 = arith.constant 0 : i32
    %c0_i32_0 = arith.constant 0 : i32
    return %arg0, %c0_i32, %1 : i32, i32, i32
  }
  func.func @transform_7(%arg0: i32, %arg1: i32, %arg2: i32) -> (i32, i32, i32) {
    %c1_i32 = arith.constant 1 : i32
    %0 = arith.muli %arg1, %c1_i32 : i32
    %1 = arith.addi %0, %arg2 : i32
    %c0_i32 = arith.constant 0 : i32
    %c0_i32_0 = arith.constant 0 : i32
    return %arg0, %c0_i32, %1 : i32, i32, i32
  }
}

</mosaic_0001>

<llo_original>
// kernel: tpu_custom_call.1
$region0: #{tpu_custom_call.1}
  #allocation0 [shape = 'u32[]', space=smem, size = 0x4, offset = 0x4, fixed_abs, tag = 'smem constant byte address 0x4 - core index']
  #allocation1 [shape = 'u32[144,128]{1,0:T(1,128)}', space=vmem, size = 0x12000, scoped, tag = 'internal scratch']
  #allocation2 [shape = 'bf16[4,2]{1,0:T(4,128)(2,1)}', space=vmem, size = 0x400, scoped, tag = 'scratch operand']
  %s0 = inlined_call_operand.vmem [shape: f32[2,4,16], index: 0, kind: input, shape index: {}]
  %s1 = inlined_call_operand.vmem [shape: f32[2,4,16], index: 1, kind: input, shape index: {}]
  %s2 = inlined_call_operand.vmem [shape: bf16[8,8], index: 2, kind: input, shape index: {}]
  %s3 = inlined_call_operand.vmem [shape: f32[8,1], index: 3, kind: input, shape index: {}]
  %s4 = inlined_call_operand.vmem [shape: bf16[8,4], index: 4, kind: input, shape index: {}]
  %s5 = inlined_call_operand.vmem [shape: f32[8,1], index: 5, kind: input, shape index: {}]
  %s6 = inlined_call_operand.hbm [shape: f32[2,4,16], index: 6, kind: output, shape index: {0}]
  %s7 = inlined_call_operand.hbm [shape: f32[2,4,16], index: 7, kind: output, shape index: {1}]
  %8 = xla_tuple %s6, %s7
  %s9 = sld [smem:[#allocation0]]
  $region77: #{tpu_custom_call.1} parent=0
    _
  %s11 = ssub.s32 1, %s9
  %s12 = scalar_select 0, %s11, %s9
  $region1: #{tpu_custom_call.1} parent=0
    #allocation3 [shape = 'u8[4096]{0}', space=vmem, size = 0x1000, scoped, tag = 'output window, operand 0']
    #allocation4 [shape = 's32[2]{0}', space=sflag, size = 0x8, scoped, tag = 'scoped memory for tpu_custom_call.1']
    #allocation5 [shape = 'u8[4096]{0}', space=vmem, size = 0x1000, scoped, tag = 'output window, operand 1']
    #allocation6 [shape = 's32[2]{0}', space=sflag, size = 0x8, scoped, tag = 'scoped memory for tpu_custom_call.1']
    %13 = vsyncpa [#allocation4], 0
    %s14 = scalar_lea.sflag [#allocation4], 1
    %15 = vsyncpa %s14, 0
    %16 = vsyncpa [#allocation6], 0
    %s17 = scalar_lea.sflag [#allocation6], 1
    %18 = vsyncpa %s17, 0
    loop: start=0, step=1, limit=4
    $region2: #{tpu_custom_call.1} parent=1 // loop_pre_header
      _
    $region3: #{tpu_custom_call.1} parent=1 // loop_header
      %s20 = sphi 0, %s24
      %p21 = scmp.ge.s32.totalorder %s20, 4
      %s27 = sphi 0, %s46
      %s28 = sphi 0, %s42
      %s29 = sphi 0, %s38
      %s30 = sphi 0, %s27
      %s31 = sphi 0, %s28
      %s32 = sphi 0, %s29
      %s33 = sphi 0, %s30
      %s34 = sphi 0, %s31
      %s35 = sphi 0, %s32
      %s53 = sphi 0, %s55
      %s56 = sphi 0, %s53
      %s57 = sphi 0, %s56
      %s73 = sphi 0, %s57
      %s87 = sphi 0, %s89
      %s90 = sphi 0, %s87
      %s91 = sphi 0, %s90
      %s107 = sphi 0, %s91
      %s111 = sphi 0, %s111
      %s113 = sphi 0, %s111
      %s114 = sphi 0, %s113
      %s128 = sphi 0, %s114
      %s132 = sphi 0, %s132
      %s134 = sphi 0, %s132
      %s135 = sphi 0, %s134
      %s149 = sphi 0, %s135
      %s153 = sphi 0, %s153
      %s155 = sphi 0, %s153
      %s156 = sphi 0, %s155
      %s170 = sphi 0, %s156
      %s174 = sphi 0, %s174
      %s176 = sphi 0, %s174
      %s177 = sphi 0, %s176
      %s191 = sphi 0, %s177
      %s201 = sphi 0, %s203
      %s204 = sphi 0, %s201
      %s205 = sphi 0, %s204
      %s221 = sphi 0, %s205
      %s231 = sphi 0, %s233
      %s234 = sphi 0, %s231
      %s235 = sphi 0, %s234
      %s251 = sphi 0, %s235
    $region4: #{tpu_custom_call.1} parent=1 // loop_header_branch
      %23 = sbr.rel (%p21) target = $region8
    $region5: #{tpu_custom_call.1} parent=1 // loop_body
      %s25 = ssub.s32 %s20, 1
      %s26 = ssub.s32 %s20, 2
      %s36 = sadd.s32 1, %s29
      %p37 = scmp.ge.s32.totalorder %s36, 1
      %s38 = scalar_select %p37, 0, %s36
      %s39 = sadd.s32 1, %s28
      %s40 = scalar_select %p37, %s39, %s28
      %p41 = scmp.ge.s32.totalorder %s40, 1
      %s42 = scalar_select %p41, 0, %s40
      %s43 = sadd.s32 1, %s27
      %s44 = scalar_select %p41, %s43, %s27
      %p45 = scmp.ge.s32.totalorder %s44, 2
      %s46 = scalar_select %p45, 0, %s44
      %s47 = sadd.s32 %s28, %s29
      %s48 = sadd.s32 %s42, %s38
      %s49 = ssub.s32 %s27, %s46
      %s50 = ssub.s32 %s47, %s48
      %s51 = sor.u32 %s49, %s50
      %p52 = scmp.eq.s32.totalorder %s51, 0
      %s54 = sadd.s32 %s53, 1
      %s55 = scalar_select %p52, %s53, %s54
      %p58 = pneg %p52
      %p59 = scmp.eq.s32.totalorder %s20, 1
      %p60 = por %p58, %p59
      %p61 = scmp.ne.s32.totalorder %s53, %s56
      %p62 = scmp.eq.s32.totalorder %s20, 0
      %p63 = por %p61, %p62
      %p64 = scmp.ne.s32.totalorder %s53, %s56
      %p65 = scmp.eq.s32.totalorder %s25, 1
      %p66 = por %p64, %p65
      %p67 = scmp.ne.s32.totalorder %s56, %s57
      %p68 = scmp.eq.s32.totalorder %s25, 0
      %p69 = por %p67, %p68
      %p70 = scmp.ne.s32.totalorder %s56, %s57
      %p71 = scmp.eq.s32.totalorder %s26, 1
      %p72 = por %p70, %p71
      %p74 = scmp.ne.s32.totalorder %s57, %s73
      %p75 = scmp.eq.s32.totalorder %s26, 0
      %p76 = por %p74, %p75
      %s77 = ssub.s32 %s28, 1
      %p78 = scmp.gt.s32.totalorder %s77, 0
      %s79 = scalar_select %p78, %s77, 0
      %s80 = ssub.s32 %s42, 1
      %p81 = scmp.gt.s32.totalorder %s80, 0
      %s82 = scalar_select %p81, %s80, 0
      %s83 = ssub.s32 %s27, %s46
      %s84 = ssub.s32 %s79, %s82
      %s85 = sor.u32 %s83, %s84
      %p86 = scmp.eq.s32.totalorder %s85, 0
      %s88 = sadd.s32 %s87, 1
      %s89 = scalar_select %p86, %s87, %s88
      %p92 = pneg %p86
      %p93 = scmp.eq.s32.totalorder %s20, 1
      %p94 = por %p92, %p93
      %p95 = scmp.ne.s32.totalorder %s87, %s90
      %p96 = scmp.eq.s32.totalorder %s20, 0
      %p97 = por %p95, %p96
      %p98 = scmp.ne.s32.totalorder %s87, %s90
      %p99 = scmp.eq.s32.totalorder %s25, 1
      %p100 = por %p98, %p99
      %p101 = scmp.ne.s32.totalorder %s90, %s91
      %p102 = scmp.eq.s32.totalorder %s25, 0
      %p103 = por %p101, %p102
      %p104 = scmp.ne.s32.totalorder %s90, %s91
      %p105 = scmp.eq.s32.totalorder %s26, 1
      %p106 = por %p104, %p105
      %p108 = scmp.ne.s32.totalorder %s91, %s107
      %p109 = scmp.eq.s32.totalorder %s26, 0
      %p110 = por %p108, %p109
      %s112 = sadd.s32 %s111, 1
      %p115 = scmp.eq.s32.totalorder %s20, 1
      %p116 = scmp.ne.s32.totalorder %s111, %s113
      %p117 = scmp.eq.s32.totalorder %s20, 0
      %p118 = por %p116, %p117
      %p119 = scmp.ne.s32.totalorder %s111, %s113
      %p120 = scmp.eq.s32.totalorder %s25, 1
      %p121 = por %p119, %p120
      %p122 = scmp.ne.s32.totalorder %s113, %s114
      %p123 = scmp.eq.s32.totalorder %s25, 0
      %p124 = por %p122, %p123
      %p125 = scmp.ne.s32.totalorder %s113, %s114
      %p126 = scmp.eq.s32.totalorder %s26, 1
      %p127 = por %p125, %p126
      %p129 = scmp.ne.s32.totalorder %s114, %s128
      %p130 = scmp.eq.s32.totalorder %s26, 0
      %p131 = por %p129, %p130
      %s133 = sadd.s32 %s132, 1
      %p136 = scmp.eq.s32.totalorder %s20, 1
      %p137 = scmp.ne.s32.totalorder %s132, %s134
      %p138 = scmp.eq.s32.totalorder %s20, 0
      %p139 = por %p137, %p138
      %p140 = scmp.ne.s32.totalorder %s132, %s134
      %p141 = scmp.eq.s32.totalorder %s25, 1
      %p142 = por %p140, %p141
      %p143 = scmp.ne.s32.totalorder %s134, %s135
      %p144 = scmp.eq.s32.totalorder %s25, 0
      %p145 = por %p143, %p144
      %p146 = scmp.ne.s32.totalorder %s134, %s135
      %p147 = scmp.eq.s32.totalorder %s26, 1
      %p148 = por %p146, %p147
      %p150 = scmp.ne.s32.totalorder %s135, %s149
      %p151 = scmp.eq.s32.totalorder %s26, 0
      %p152 = por %p150, %p151
      %s154 = sadd.s32 %s153, 1
      %p157 = scmp.eq.s32.totalorder %s20, 1
      %p158 = scmp.ne.s32.totalorder %s153, %s155
      %p159 = scmp.eq.s32.totalorder %s20, 0
      %p160 = por %p158, %p159
      %p161 = scmp.ne.s32.totalorder %s153, %s155
      %p162 = scmp.eq.s32.totalorder %s25, 1
      %p163 = por %p161, %p162
      %p164 = scmp.ne.s32.totalorder %s155, %s156
      %p165 = scmp.eq.s32.totalorder %s25, 0
      %p166 = por %p164, %p165
      %p167 = scmp.ne.s32.totalorder %s155, %s156
      %p168 = scmp.eq.s32.totalorder %s26, 1
      %p169 = por %p167, %p168
      %p171 = scmp.ne.s32.totalorder %s156, %s170
      %p172 = scmp.eq.s32.totalorder %s26, 0
      %p173 = por %p171, %p172
      %s175 = sadd.s32 %s174, 1
      %p178 = scmp.eq.s32.totalorder %s20, 1
      %p179 = scmp.ne.s32.totalorder %s174, %s176
      %p180 = scmp.eq.s32.totalorder %s20, 0
      %p181 = por %p179, %p180
      %p182 = scmp.ne.s32.totalorder %s174, %s176
      %p183 = scmp.eq.s32.totalorder %s25, 1
      %p184 = por %p182, %p183
      %p185 = scmp.ne.s32.totalorder %s176, %s177
      %p186 = scmp.eq.s32.totalorder %s25, 0
      %p187 = por %p185, %p186
      %p188 = scmp.ne.s32.totalorder %s176, %s177
      %p189 = scmp.eq.s32.totalorder %s26, 1
      %p190 = por %p188, %p189
      %p192 = scmp.ne.s32.totalorder %s177, %s191
      %p193 = scmp.eq.s32.totalorder %s26, 0
      %p194 = por %p192, %p193
      %s195 = sadd.s32 %s28, %s29
      %s196 = sadd.s32 %s42, %s38
      %s197 = ssub.s32 %s27, %s46
      %s198 = ssub.s32 %s195, %s196
      %s199 = sor.u32 %s197, %s198
      %p200 = scmp.eq.s32.totalorder %s199, 0
      %s202 = sadd.s32 %s201, 1
      %s203 = scalar_select %p200, %s201, %s202
      %p206 = pneg %p200
      %p207 = scmp.eq.s32.totalorder %s20, 1
      %p208 = por %p206, %p207
      %p209 = scmp.ne.s32.totalorder %s201, %s204
      %p210 = scmp.eq.s32.totalorder %s20, 0
      %p211 = por %p209, %p210
      %p212 = scmp.ne.s32.totalorder %s201, %s204
      %p213 = scmp.eq.s32.totalorder %s25, 1
      %p214 = por %p212, %p213
      %p215 = scmp.ne.s32.totalorder %s204, %s205
      %p216 = scmp.eq.s32.totalorder %s25, 0
      %p217 = por %p215, %p216
      %p218 = scmp.ne.s32.totalorder %s204, %s205
      %p219 = scmp.eq.s32.totalorder %s26, 1
      %p220 = por %p218, %p219
      %p222 = scmp.ne.s32.totalorder %s205, %s221
      %p223 = scmp.eq.s32.totalorder %s26, 0
      %p224 = por %p222, %p223
      %s225 = sadd.s32 %s28, %s29
      %s226 = sadd.s32 %s42, %s38
      %s227 = ssub.s32 %s27, %s46
      %s228 = ssub.s32 %s225, %s226
      %s229 = sor.u32 %s227, %s228
      %p230 = scmp.eq.s32.totalorder %s229, 0
      %s232 = sadd.s32 %s231, 1
      %s233 = scalar_select %p230, %s231, %s232
      %p236 = pneg %p230
      %p237 = scmp.eq.s32.totalorder %s20, 1
      %p238 = por %p236, %p237
      %p239 = scmp.ne.s32.totalorder %s231, %s234
      %p240 = scmp.eq.s32.totalorder %s20, 0
      %p241 = por %p239, %p240
      %p242 = scmp.ne.s32.totalorder %s231, %s234
      %p243 = scmp.eq.s32.totalorder %s25, 1
      %p244 = por %p242, %p243
      %p245 = scmp.ne.s32.totalorder %s234, %s235
      %p246 = scmp.eq.s32.totalorder %s25, 0
      %p247 = por %p245, %p246
      %p248 = scmp.ne.s32.totalorder %s234, %s235
      %p249 = scmp.eq.s32.totalorder %s26, 1
      %p250 = por %p248, %p249
      %p252 = scmp.ne.s32.totalorder %s235, %s251
      %p253 = scmp.eq.s32.totalorder %s26, 0
      %p254 = por %p252, %p253
      %p255 = scmp.le.s32.totalorder 1, %s20
      %p256 = scmp.lt.s32.totalorder %s20, 3
      %p257 = pnand %p255, %p256
      %p258 = pneg %p257
      // Predicated region
      $region9: #{tpu_custom_call.1} parent=5 // pred_check
        _
      $region10: #{tpu_custom_call.1} parent=5 // pred_check_branch
        %260 = sbr.rel (%p257) target = $region12
      $region11: #{tpu_custom_call.1} parent=5 // pred_region
        %s261 = ssub.s32 %s20, 1
        // Predicated region
        $region13: #{tpu_custom_call.1} parent=11 // pred_check
          %p262 = pneg %p124
        $region14: #{tpu_custom_call.1} parent=11 // pred_check_branch
          %264 = sbr.rel (%p262) target = $region16
        $region15: #{tpu_custom_call.1} parent=11 // pred_region
          _
        $region16: #{tpu_custom_call.1} parent=11 // pred_fallthru
          _
        // Predicated region
        $region17: #{tpu_custom_call.1} parent=11 // pred_check
          %p265 = pneg %p145
        $region18: #{tpu_custom_call.1} parent=11 // pred_check_branch
          %267 = sbr.rel (%p265) target = $region20
        $region19: #{tpu_custom_call.1} parent=11 // pred_region
          _
        $region20: #{tpu_custom_call.1} parent=11 // pred_fallthru
          _
        // Predicated region
        $region21: #{tpu_custom_call.1} parent=11 // pred_check
          %p268 = pneg %p166
        $region22: #{tpu_custom_call.1} parent=11 // pred_check_branch
          %270 = sbr.rel (%p268) target = $region24
        $region23: #{tpu_custom_call.1} parent=11 // pred_region
          _
        $region24: #{tpu_custom_call.1} parent=11 // pred_fallthru
          _
        // Predicated region
        $region25: #{tpu_custom_call.1} parent=11 // pred_check
          %p271 = pneg %p187
        $region26: #{tpu_custom_call.1} parent=11 // pred_check_branch
          %273 = sbr.rel (%p271) target = $region28
        $region27: #{tpu_custom_call.1} parent=11 // pred_region
          _
        $region28: #{tpu_custom_call.1} parent=11 // pred_fallthru
          _
      $region12: #{tpu_custom_call.1} parent=5 // pred_fallthru
        _
      %p274 = scmp.lt.s32.totalorder %s20, 2
      // Predicated region
      $region29: #{tpu_custom_call.1} parent=5 // pred_check
        %p275 = pneg %p274
      $region30: #{tpu_custom_call.1} parent=5 // pred_check_branch
        %277 = sbr.rel (%p275) target = $region32
      $region31: #{tpu_custom_call.1} parent=5 // pred_region
        // Predicated region
        $region33: #{tpu_custom_call.1} parent=31 // pred_check
          %p278 = pneg %p63
        $region34: #{tpu_custom_call.1} parent=31 // pred_check_branch
          %280 = sbr.rel (%p278) target = $region36
        $region35: #{tpu_custom_call.1} parent=31 // pred_region
          %s281 = sadd.s32 %s28, %s29
          %p282 = scmp.lt.s32.totalorder %s27, 1
          %s283 = scalar_select %p282, %s27, 1
          %p284 = scmp.lt.s32.totalorder %s281, 0
          %s285 = scalar_select %p284, %s281, 0
          %s286 = sadd.s32 %s285, %s283
          %s287 = smul.addr %s286, 4
          %s288 = scalar_lea.vmem %s0, %s287
          %s289 = sadd.s32 %s28, %s29
        $region36: #{tpu_custom_call.1} parent=31 // pred_fallthru
          _
        // Predicated region
        $region37: #{tpu_custom_call.1} parent=31 // pred_check
          %p290 = pneg %p97
        $region38: #{tpu_custom_call.1} parent=31 // pred_check_branch
          %292 = sbr.rel (%p290) target = $region40
        $region39: #{tpu_custom_call.1} parent=31 // pred_region
          %s293 = ssub.s32 %s28, 1
          %p294 = scmp.gt.s32.totalorder %s293, 0
          %s295 = scalar_select %p294, %s293, 0
          %p296 = scmp.lt.s32.totalorder %s27, 1
          %s297 = scalar_select %p296, %s27, 1
          %p298 = scmp.lt.s32.totalorder %s295, 0
          %s299 = scalar_select %p298, %s295, 0
          %s300 = sadd.s32 %s299, %s297
          %s301 = smul.addr %s300, 4
          %s302 = scalar_lea.vmem %s1, %s301
          %s303 = ssub.s32 %s28, 1
          %p304 = scmp.gt.s32.totalorder %s303, 0
          %s305 = scalar_select %p304, %s303, 0
        $region40: #{tpu_custom_call.1} parent=31 // pred_fallthru
          _
      $region32: #{tpu_custom_call.1} parent=5 // pred_fallthru
        _
      %p306 = scmp.le.s32.totalorder 1, %s20
      %p307 = scmp.lt.s32.totalorder %s20, 3
      %p308 = pnand %p306, %p307
      %p309 = pneg %p308
      // Predicated region
      $region41: #{tpu_custom_call.1} parent=5 // pred_check
        _
      $region42: #{tpu_custom_call.1} parent=5 // pred_check_branch
        %311 = sbr.rel (%p308) target = $region44
      $region43: #{tpu_custom_call.1} parent=5 // pred_region
        %s312 = ssub.s32 %s20, 1
        %s313 = sadd.s32 %s31, %s32
        %p314 = scmp.lt.s32.totalorder %s30, 1
        %s315 = scalar_select %p314, %s30, 1
        %p316 = scmp.lt.s32.totalorder %s313, 0
        %s317 = scalar_select %p316, %s313, 0
        %s318 = sadd.s32 %s317, %s315
        %s319 = smul.addr %s318, 4
        %s320 = scalar_lea.vmem %s0, %s319
        %p321 = pneg %p69
        %p322 = pneg %p66
        %s323 = ssub.s32 %s31, 1
        %p324 = scmp.gt.s32.totalorder %s323, 0
        %s325 = scalar_select %p324, %s323, 0
        %p326 = scmp.lt.s32.totalorder %s30, 1
        %s327 = scalar_select %p326, %s30, 1
        %p328 = scmp.lt.s32.totalorder %s325, 0
        %s329 = scalar_select %p328, %s325, 0
        %s330 = sadd.s32 %s329, %s327
        %s331 = smul.addr %s330, 4
        %s332 = scalar_lea.vmem %s1, %s331
        %p333 = pneg %p103
        %p334 = pneg %p100
        %p335 = pneg %p124
        %p336 = pneg %p121
        %p337 = pneg %p145
        %p338 = pneg %p142
        %p339 = pneg %p166
        %p340 = pneg %p163
        %p341 = pneg %p187
        %p342 = pneg %p184
        %p343 = pneg %p217
        %p344 = pneg %p214
        %s345 = sand.u32 %s204, 1
        %s346 = scalar_lea.sflag [#allocation4], %s345
        %s347 = sand.u32 %s204, 1
        %s348 = smul.addr %s347, 4
        %s349 = scalar_lea.vmem [#allocation3], %s348
        %p350 = pneg %p247
        %p351 = pneg %p244
        %s352 = sand.u32 %s234, 1
        %s353 = scalar_lea.sflag [#allocation6], %s352
        %s354 = sand.u32 %s234, 1
        %s355 = smul.addr %s354, 4
        %s356 = scalar_lea.vmem [#allocation5], %s355
        %s357 = sadd.s32 %s31, %s32
        %p358 = scmp.lt.s32.totalorder %s30, 1
        %s359 = scalar_select %p358, %s30, 1
        %p360 = scmp.lt.s32.totalorder %s357, 0
        %s361 = scalar_select %p360, %s357, 0
        %s362 = sadd.s32 %s361, %s359
        %s363 = smul.addr %s362, 4
        %s364 = scalar_lea.vmem %s0, %s363
        %s365 = sadd.s32 %s31, %s32
        %s366 = ssub.s32 %s31, 1
        %p367 = scmp.gt.s32.totalorder %s366, 0
        %s368 = scalar_select %p367, %s366, 0
        %p369 = scmp.lt.s32.totalorder %s30, 1
        %s370 = scalar_select %p369, %s30, 1
        %p371 = scmp.lt.s32.totalorder %s368, 0
        %s372 = scalar_select %p371, %s368, 0
        %s373 = sadd.s32 %s372, %s370
        %s374 = smul.addr %s373, 4
        %s375 = scalar_lea.vmem %s1, %s374
        %s376 = ssub.s32 %s31, 1
        %p377 = scmp.gt.s32.totalorder %s376, 0
        %s378 = scalar_select %p377, %s376, 0
        %s379 = sadd.s32 %s31, %s32
        %s380 = sadd.s32 %s31, %s32
        %v382 = vld [vmem:[%s364] sm:$0xf]
        %v383 = vpack.c.bf16 %v382, %v382
        %p384 = scmp.eq.s32.totalorder %s32, 0
        // Predicated region
        $region45: #{tpu_custom_call.1} parent=43 // pred_check
          %p385 = pneg %p384
        $region46: #{tpu_custom_call.1} parent=43 // pred_check_branch
          %387 = sbr.rel (%p385) target = $region48
        $region47: #{tpu_custom_call.1} parent=43 // pred_region
          %p388 = scmp.eq.s32.totalorder %s31, 0
          // Predicated region
          $region49: #{tpu_custom_call.1} parent=47 // pred_check
            %p389 = pneg %p388
          $region50: #{tpu_custom_call.1} parent=47 // pred_check_branch
            %391 = sbr.rel (%p389) target = $region52
          $region51: #{tpu_custom_call.1} parent=47 // pred_region
            %vm392 = vcmask 9216
            %393 = vst.msk [vmem:[#allocation2] sm:$0x3] %vm392, 0
          $region52: #{tpu_custom_call.1} parent=47 // pred_fallthru
            _
          %p394 = scmp.gt.s32.totalorder %s31, 0
          // Predicated region
          $region53: #{tpu_custom_call.1} parent=47 // pred_check
            %p395 = pneg %p394
          $region54: #{tpu_custom_call.1} parent=47 // pred_check_branch
            %397 = sbr.rel (%p395) target = $region56
          $region55: #{tpu_custom_call.1} parent=47 // pred_region
            %v398 = vld [vmem:[%s375] sm:$0xf]
            %v399 = vpack.c.bf16 %v398, %v398
            %v402 = vunpack.c.l.s4 1983009808
            %v403 = vunpack.c.0.s8 %v402
            %v404 = vlaneseq
            %v405 = vshrl.u32 %v404, 7
            %v406 = vsub.s32 %v403, %v405
            %v407 = vrot.slane %v399, %v406
            %408 = vrot.lane.b32.xlu0 %v407, 114
            %v409 = vpop.permute.xlu0 %408
            %vm411 = vcmask 9216
            %412 = vst.msk [vmem:[#allocation2] sm:$0x3] %vm411, %v409
          $region56: #{tpu_custom_call.1} parent=47 // pred_fallthru
            _
        $region48: #{tpu_custom_call.1} parent=43 // pred_fallthru
          _
        %v413 = vld [vmem:[#allocation2] sm:$0x3]
        %415 = vrot.lane.b32.xlu0 %v383, 2
        %v416 = vpop.permute.xlu0 %415
        %vm417 = vcmask 15360
        %v420 = vsel %vm417, %v413, %v416
        %v422 = vrot.slane %v420, 6
        %423 = vrot.lane.b32.xlu0 %v422, 126
        %v424 = vpop.permute.xlu0 %423
        %vm425 = vcmask 1041408
        %v427 = vsel %vm425, %v420, %v424
        %v428 = vld [vmem:[%s2] sm:$0xf]
        %v429 = vld [vmem:[%s3] sm:$0xff]
        %431 = vset.pattern.permute.xlu0 0
        %432 = vperm.xlu0 %431, %v429
        %v433 = vpop.permute.xlu0 %432
        %vm435 = vcmask 64512
        %v437 = vsel %vm435, %v428, 0
        %vm439 = vcmask 1043456
        %v440 = vsel %vm439, %v427, 0
        %442 = vmatprep.subr.bf16.mxu0 0
        %443 = vmatpush1.bf16.msra.mxu0 %v440
        %444 = vmatprep.subr.bf16.mxu0 0
        %445 = vmatpush1.bf16.msra.mxu0 0
        %446 = vmatprep.subr.bf16.mxu0 0
        %447 = vmatpush1.bf16.msra.mxu0 0
        %448 = vmatprep.subr.bf16.mxu0 0
        %449 = vmatpush1.bf16.msra.mxu0 0
        %450 = vmatprep.subr.bf16.mxu0 0
        %451 = vmatpush1.bf16.msra.mxu0 0
        %452 = vmatprep.subr.bf16.mxu0 0
        %453 = vmatpush1.bf16.msra.mxu0 0
        %454 = vmatprep.subr.bf16.mxu0 0
        %455 = vmatpush1.bf16.msra.mxu0 0
        %456 = vmatprep.subr.bf16.mxu0 0
        %457 = vmatpush1.bf16.msra.mxu0 0
        %458 = vmatprep.subr.bf16.mxu0 0
        %459 = vmatpush1.bf16.msra.mxu0 0
        %460 = vmatprep.subr.bf16.mxu0 0
        %461 = vmatpush1.bf16.msra.mxu0 0
        %462 = vmatprep.subr.bf16.mxu0 0
        %463 = vmatpush1.bf16.msra.mxu0 0
        %464 = vmatprep.subr.bf16.mxu0 0
        %465 = vmatpush1.bf16.msra.mxu0 0
        %466 = vmatprep.subr.bf16.mxu0 0
        %467 = vmatpush1.bf16.msra.mxu0 0
        %468 = vmatprep.subr.bf16.mxu0 0
        %469 = vmatpush1.bf16.msra.mxu0 0
        %470 = vmatprep.subr.bf16.mxu0 0
        %471 = vmatpush1.bf16.msra.mxu0 0
        %472 = vmatprep.subr.bf16.mxu0 0
        %473 = vmatpush1.bf16.msra.mxu0 0
        %474 = vmatprep.mubr.bf16.mxu0 0
        %475 = vmatmul.mubr.bf16.gmra.mrb[0].mxu0 %v437
        %v476 = vpop.f32.mrb[0].mxu0
        %v477 = vadd.f32 %v433, %v476
        %v478 = vpop.f32.mrb[0].mxu0
        %v479 = vpop.f32.mrb[0].mxu0
        %v480 = vpop.f32.mrb[0].mxu0
        %481 = vdwg.mxu0
        %v482 = vtanh.pop %v477
        %v483 = vxor.u32 %v477, 2147483648
        %v484 = vmul.f32 %v483, 1.442695
        %v485 = vpow.pop %v484
        %v486 = vadd.f32 %v485, 1.0
        %v487 = vrcp.pop %v486
        %v488 = vmul.f32 1.0, %v487
        %v490 = vrot.slane %v488, 4
        %v492 = vmul.f32 %v482, %v490
        %v493 = vld [vmem:[%s4] sm:$0xf]
        %v494 = vpack.c.bf16 %v492, %v492
        %v495 = vld [vmem:[%s5] sm:$0xff]
        %497 = vset.pattern.permute.xlu0 0
        %498 = vperm.xlu0 %497, %v495
        %v499 = vpop.permute.xlu0 %498
        %vm501 = vcmask 31744
        %v503 = vsel %vm501, %v493, 0
        %v506 = vsel %vm425, %v494, 0
        %508 = vmatprep.subr.bf16.mxu0 0
        %509 = vmatpush1.bf16.msra.mxu0 %v506
        %510 = vmatprep.subr.bf16.mxu0 0
        %511 = vmatpush1.bf16.msra.mxu0 0
        %512 = vmatprep.subr.bf16.mxu0 0
        %513 = vmatpush1.bf16.msra.mxu0 0
        %514 = vmatprep.subr.bf16.mxu0 0
        %515 = vmatpush1.bf16.msra.mxu0 0
        %516 = vmatprep.subr.bf16.mxu0 0
        %517 = vmatpush1.bf16.msra.mxu0 0
        %518 = vmatprep.subr.bf16.mxu0 0
        %519 = vmatpush1.bf16.msra.mxu0 0
        %520 = vmatprep.subr.bf16.mxu0 0
        %521 = vmatpush1.bf16.msra.mxu0 0
        %522 = vmatprep.subr.bf16.mxu0 0
        %523 = vmatpush1.bf16.msra.mxu0 0
        %524 = vmatprep.subr.bf16.mxu0 0
        %525 = vmatpush1.bf16.msra.mxu0 0
        %526 = vmatprep.subr.bf16.mxu0 0
        %527 = vmatpush1.bf16.msra.mxu0 0
        %528 = vmatprep.subr.bf16.mxu0 0
        %529 = vmatpush1.bf16.msra.mxu0 0
        %530 = vmatprep.subr.bf16.mxu0 0
        %531 = vmatpush1.bf16.msra.mxu0 0
        %532 = vmatprep.subr.bf16.mxu0 0
        %533 = vmatpush1.bf16.msra.mxu0 0
        %534 = vmatprep.subr.bf16.mxu0 0
        %535 = vmatpush1.bf16.msra.mxu0 0
        %536 = vmatprep.subr.bf16.mxu0 0
        %537 = vmatpush1.bf16.msra.mxu0 0
        %538 = vmatprep.subr.bf16.mxu0 0
        %539 = vmatpush1.bf16.msra.mxu0 0
        %540 = vmatprep.mubr.bf16.mxu0 0
        %541 = vmatmul.mubr.bf16.gmra.mrb[0].mxu0 %v503
        %v542 = vpop.f32.mrb[0].mxu0
        %v543 = vadd.f32 %v499, %v542
        %v544 = vpop.f32.mrb[0].mxu0
        %v545 = vpop.f32.mrb[0].mxu0
        %v546 = vpop.f32.mrb[0].mxu0
        %547 = vdwg.mxu0
        %v548 = vadd.f32 %v382, %v543
        %vm549 = vcmask 125952
        %550 = vst.msk [vmem:[%s349] sm:$0xf] %vm549, %v548
        %vm551 = vcmask 130052
        %552 = vst.msk [vmem:[%s356 - $0x4] sm:$0xf0] %vm551, %v543
        %v554 = vunpack.c.l.s4 1983009808
        %v555 = vunpack.c.0.s8 %v554
        %v556 = vlaneseq
        %v557 = vshrl.u32 %v556, 7
        %v558 = vsub.s32 %v555, %v557
        %v559 = vrot.slane %v420, %v558
        %560 = vrot.lane.b32.xlu0 %v559, 112
        %v561 = vpop.permute.xlu0 %560
        %vm563 = vcmask 9216
        %564 = vst.msk [vmem:[#allocation2] sm:$0x3] %vm563, %v561
        %s565 = sand.u32 %s204, 1
        %s566 = scalar_lea.sflag [#allocation4], %s565
        %s567 = sand.u32 %s204, 1
        %s568 = smul.addr %s567, 4
        %s569 = scalar_lea.vmem [#allocation3], %s568
        %s570 = sand.u32 %s234, 1
        %s571 = scalar_lea.sflag [#allocation6], %s570
        %s572 = sand.u32 %s234, 1
        %s573 = smul.addr %s572, 4
        %s574 = scalar_lea.vmem [#allocation5], %s573
        // Predicated region
        $region57: #{tpu_custom_call.1} parent=43 // pred_check
          %p575 = pneg %p214
        $region58: #{tpu_custom_call.1} parent=43 // pred_check_branch
          %577 = sbr.rel (%p575) target = $region60
        $region59: #{tpu_custom_call.1} parent=43 // pred_region
          %s578 = sadd.s32 %s31, %s32
          %s580 = ssub.s32 64, 64
          %581 = vsyncadd %s566, %s580
          %s582 = sadd.s32 %s578, %s30
          %s583 = smul.addr %s582, 64
          %s584 = scalar_lea.hbm %s6, %s583
          %s586 = sshll.u32 %s569, 4
          %s587 = int_to_ptr.vmem [resolvable:$true] %s586
          %589 = dma.vmem_to_hbm [thread:$0]  %s587, 64, %s584, %s566
        $region60: #{tpu_custom_call.1} parent=43 // pred_fallthru
          _
        // Predicated region
        $region61: #{tpu_custom_call.1} parent=43 // pred_check
          %p590 = pneg %p244
        $region62: #{tpu_custom_call.1} parent=43 // pred_check_branch
          %592 = sbr.rel (%p590) target = $region64
        $region63: #{tpu_custom_call.1} parent=43 // pred_region
          %s593 = sadd.s32 %s31, %s32
          %s595 = ssub.s32 64, 64
          %596 = vsyncadd %s571, %s595
          %s597 = sadd.s32 %s593, %s30
          %s598 = smul.addr %s597, 64
          %s599 = scalar_lea.hbm %s7, %s598
          %s601 = sshll.u32 %s574, 4
          %s602 = int_to_ptr.vmem [resolvable:$true] %s601
          %604 = dma.vmem_to_hbm [thread:$0]  %s602, 64, %s599, %s571
        $region64: #{tpu_custom_call.1} parent=43 // pred_fallthru
          _
      $region44: #{tpu_custom_call.1} parent=5 // pred_fallthru
        _
      %p605 = scmp.le.s32.totalorder 2, %s20
      // Predicated region
      $region65: #{tpu_custom_call.1} parent=5 // pred_check
        %p606 = pneg %p605
      $region66: #{tpu_custom_call.1} parent=5 // pred_check_branch
        %608 = sbr.rel (%p606) target = $region68
      $region67: #{tpu_custom_call.1} parent=5 // pred_region
        %s609 = ssub.s32 %s20, 2
        // Predicated region
        $region69: #{tpu_custom_call.1} parent=67 // pred_check
          %p610 = pneg %p220
        $region70: #{tpu_custom_call.1} parent=67 // pred_check_branch
          %612 = sbr.rel (%p610) target = $region72
        $region71: #{tpu_custom_call.1} parent=67 // pred_region
          %s613 = sand.u32 %s205, 1
          %s614 = scalar_lea.sflag [#allocation4], %s613
          %s615 = sand.u32 %s205, 1
          %s616 = smul.addr %s615, 4
          %s617 = scalar_lea.vmem [#allocation3], %s616
          %618 = dma.done %s614, 64
        $region72: #{tpu_custom_call.1} parent=67 // pred_fallthru
          _
        // Predicated region
        $region73: #{tpu_custom_call.1} parent=67 // pred_check
          %p619 = pneg %p250
        $region74: #{tpu_custom_call.1} parent=67 // pred_check_branch
          %621 = sbr.rel (%p619) target = $region76
        $region75: #{tpu_custom_call.1} parent=67 // pred_region
          %s622 = sand.u32 %s235, 1
          %s623 = scalar_lea.sflag [#allocation6], %s622
          %s624 = sand.u32 %s235, 1
          %s625 = smul.addr %s624, 4
          %s626 = scalar_lea.vmem [#allocation5], %s625
          %627 = dma.done %s623, 64
        $region76: #{tpu_custom_call.1} parent=67 // pred_fallthru
          _
      $region68: #{tpu_custom_call.1} parent=5 // pred_fallthru
        _
    $region6: #{tpu_custom_call.1} parent=1 // loop_footer
      %s24 = sadd.s32 1, %s20
    $region7: #{tpu_custom_call.1} parent=1 // loop_footer_branch
      %19 = sbr.rel target = $region3
    $region8: #{tpu_custom_call.1} parent=1 // loop_exit
      _
    %628 = vsyncpa [#allocation4], 1
    %s629 = scalar_lea.sflag [#allocation4], 1
    %630 = vsyncpa %s629, 1
    %631 = vsyncpa [#allocation6], 1
    %s632 = scalar_lea.sflag [#allocation6], 1
    %633 = vsyncpa %s632, 1

</llo_original>
